<compile_context>
chip_gen: v5e
topology: v5e:2x2
jax: 0.10.0
libtpu: 0.0.40
codegen_flags: <defaults>
</compile_context>

<pallas_src>
import jax
import jax.numpy as jnp
from jax.experimental import pallas as pl
from jax.experimental.pallas import tpu as pltpu


def _round_up(x, m):
    return ((x + m - 1) // m) * m


def _cdiv(a, b):
    return -(-a // b)


def _default_min_blocks():
    """Best-effort: on v7x (2 TensorCores/chip) ask for >=2 grid blocks."""
    try:
        kind = jax.devices()[0].device_kind.lower()
        if "v7" in kind:
            return 2
    except Exception:
        pass
    return 1


def _mlp_softmax_kernel(x_ref, w1_ref, b1_ref, w2_ref, b2_ref, w3_ref, b3_ref,
                        o_ref):
    # x tile: (TB, state_dim) f32 in VMEM; cast to the matmul dtype in-kernel.
    mm_dtype = w1_ref.dtype
    x = x_ref[...].astype(mm_dtype)

    # Layer 1: (TB, state_dim) @ (state_dim, 128) -> f32 acc, bias + ReLU in f32.
    h1 = jnp.dot(x, w1_ref[...], preferred_element_type=jnp.float32) + b1_ref[...]
    h1 = jnp.maximum(h1, 0.0)

    # Layer 2: (TB, 128) @ (128, 64)
    h2 = jnp.dot(h1.astype(mm_dtype), w2_ref[...],
                 preferred_element_type=jnp.float32) + b2_ref[...]
    h2 = jnp.maximum(h2, 0.0)

    # Layer 3: (TB, 64) @ (64, n_actions) — no column padding, no masking.
    logits = jnp.dot(h2.astype(mm_dtype), w3_ref[...],
                     preferred_element_type=jnp.float32) + b3_ref[...]

    # Numerically stable softmax over the true action lanes, all f32, exact div.
    m = jnp.max(logits, axis=-1, keepdims=True)
    e = jnp.exp(logits - m)
    denom = jnp.sum(e, axis=-1, keepdims=True)
    o_ref[...] = (e * pl.reciprocal(denom, approx=False)).astype(o_ref.dtype)

    # TODO(synk): optional fused Gumbel-max action sampling via
    # pltpu.prng_seed/prng_random_bits would shrink the output to 4-8 B/row for
    # online inference, but that changes forward()'s return type, so it is left out.


def prepare_params(params, *, use_bf16=True):
    """One-time parameter prep: cast weights to the matmul dtype, biases to f32 (1, N)."""
    w1, b1, w2, b2, w3, b3 = params
    mm_dtype = jnp.bfloat16 if use_bf16 else jnp.float32
    prep = (
        w1.astype(mm_dtype), b1.reshape(1, -1).astype(jnp.float32),
        w2.astype(mm_dtype), b2.reshape(1, -1).astype(jnp.float32),
        w3.astype(mm_dtype), b3.reshape(1, -1).astype(jnp.float32),
    )
    return prep


def monte_carlo_reinforce_forward(state, prepared_params, *,
                                  block_batch=512, min_blocks=None):
    """state: (B, state_dim) f32. Returns (B, n_actions) f32 action probabilities.

    `prepared_params` must come from `prepare_params` (pre-cast weights/biases).
    """
    w1c, b1c, w2c, b2c, w3c, b3c = prepared_params
    B, state_dim = state.shape
    n_actions = w3c.shape[1]

    if min_blocks is None:
        min_blocks = _default_min_blocks()

    # Batch tiling: tiles are sublane multiples (8). Small batches collapse to a
    # single grid step (v5e/v6e); on v7x `min_blocks=2` splits across both TCs.
    b8 = _round_up(max(B, 1), 8)
    tb = min(_round_up(block_batch, 8), b8)
    if min_blocks > 1:
        tb = min(tb, _round_up(_cdiv(B, min_blocks), 8))
    tb = max(tb, 8)
    num_blocks = _cdiv(B, tb)
    b_pad = num_blocks * tb

    x = state
    if b_pad != B:
        x = jnp.pad(x, ((0, b_pad - B), (0, 0)))

    const_spec = lambda shape: pl.BlockSpec(shape, lambda i: (0, 0))

    out = pl.pallas_call(
        _mlp_softmax_kernel,
        out_shape=jax.ShapeDtypeStruct((b_pad, n_actions), jnp.float32),
        grid=(num_blocks,),
        in_specs=[
            pl.BlockSpec((tb, state_dim), lambda i: (i, 0)),   # state tile (f32)
            const_spec(w1c.shape), const_spec(b1c.shape),      # weights stay VMEM-resident
            const_spec(w2c.shape), const_spec(b2c.shape),
            const_spec(w3c.shape), const_spec(b3c.shape),
        ],
        out_specs=pl.BlockSpec((tb, n_actions), lambda i: (i, 0)),
        compiler_params=pltpu.CompilerParams(
            dimension_semantics=("parallel",)),
    )(x, w1c, b1c, w2c, b2c, w3c, b3c)

    return out if b_pad == B else out[:B]


def init_params(key, state_dim, n_actions):
    """Deterministic init mimicking nn.Linear's U(-1/sqrt(fan_in), 1/sqrt(fan_in))."""
    def linear(key, fan_in, fan_out):
        kw, kb = jax.random.split(key)
        bound = 1.0 / jnp.sqrt(jnp.float32(fan_in))
        w = jax.random.uniform(kw, (fan_in, fan_out), jnp.float32, -bound, bound)
        b = jax.random.uniform(kb, (1, fan_out), jnp.float32, -bound, bound)
        return w, b

    k1, k2, k3 = jax.random.split(key, 3)
    w1, b1 = linear(k1, state_dim, 128)
    w2, b2 = linear(k2, 128, 64)
    w3, b3 = linear(k3, 64, n_actions)
    return (w1, b1, w2, b2, w3, b3)


def reference_forward(state, params, use_bf16=True):
    """Pure-JAX reference with the same bf16-input / f32-accumulate matmul recipe."""
    w1, b1, w2, b2, w3, b3 = params
    dt = jnp.bfloat16 if use_bf16 else jnp.float32
    h1 = jnp.maximum(
        jnp.dot(state.astype(dt), w1.astype(dt),
                preferred_element_type=jnp.float32) + b1, 0.0)
    h2 = jnp.maximum(
        jnp.dot(h1.astype(dt), w2.astype(dt),
                preferred_element_type=jnp.float32) + b2, 0.0)
    logits = jnp.dot(h2.astype(dt), w3.astype(dt),
                     preferred_element_type=jnp.float32) + b3
    return jax.nn.softmax(logits, axis=-1)


def reference_forward_f32(state, params):
    w1, b1, w2, b2, w3, b3 = params
    h1 = jnp.maximum(state @ w1 + b1, 0.0)
    h2 = jnp.maximum(h1 @ w2 + b2, 0.0)
    logits = h2 @ w3 + b3
    return jax.nn.softmax(logits, axis=-1)


if __name__ == "__main__":
    key = jax.random.PRNGKey(0)
    k_param, k_state = jax.random.split(key)

    # Small shapes; batch deliberately NOT a multiple of the tile to exercise
    # the batch-padding + multi-step grid path (50 rows, 16-row tiles -> 4 steps).
    batch, state_dim, n_actions = 50, 16, 4
    params = init_params(k_param, state_dim, n_actions)
    state = jax.random.normal(k_state, (batch, state_dim), jnp.float32)

    prepped = prepare_params(params, use_bf16=True)

    # Multi-block path.
    probs = monte_carlo_reinforce_forward(state, prepped, block_batch=16)
    probs = jax.block_until_ready(probs)
    assert probs.shape == (batch, n_actions)
    assert jnp.allclose(jnp.sum(probs, axis=-1), 1.0, atol=1e-5)
    ref_bf16 = reference_forward(state, params, use_bf16=True)
    assert jnp.allclose(probs, ref_bf16, atol=1e-4, rtol=1e-3)
    ref_f32 = reference_forward_f32(state, params)
    assert jnp.allclose(probs, ref_f32, atol=1e-2, rtol=1e-2)

    # Default (single-block for this small batch on v5e/v6e; 2 blocks on v7x).
    probs2 = monte_carlo_reinforce_forward(state, prepped)
    probs2 = jax.block_until_ready(probs2)
    assert probs2.shape == (batch, n_actions)
    assert jnp.allclose(probs2, ref_bf16, atol=1e-4, rtol=1e-3)

    print("KERNEL_OK")
</pallas_src>

<mosaic_0001>
module attributes {stable_mosaic.version = 11 : i64} {
  func.func @_mlp_softmax_kernel(%arg0: i32, %arg1: memref<16x16xf32, #tpu.memory_space<vmem>>, %arg2: memref<16x128xbf16, #tpu.memory_space<vmem>>, %arg3: memref<1x128xf32, #tpu.memory_space<vmem>>, %arg4: memref<128x64xbf16, #tpu.memory_space<vmem>>, %arg5: memref<1x64xf32, #tpu.memory_space<vmem>>, %arg6: memref<64x4xbf16, #tpu.memory_space<vmem>>, %arg7: memref<1x4xf32, #tpu.memory_space<vmem>>, %arg8: memref<16x4xf32, #tpu.memory_space<vmem>>) attributes {dimension_semantics = [#tpu.dimension_semantics<parallel>], iteration_bounds = array<i64: 4>, scalar_prefetch = 0 : i64, scratch_operands = 0 : i64, tpu.core_type = #tpu.core_type<tc>, window_params = [{transform_indices = @transform_0, window_bounds = array<i64: 16, 16>}, {pipeline_mode = #tpu.pipeline_mode<synchronous>, transform_indices = @transform_1, window_bounds = array<i64: 16, 128>}, {pipeline_mode = #tpu.pipeline_mode<synchronous>, transform_indices = @transform_2, window_bounds = array<i64: 1, 128>}, {pipeline_mode = #tpu.pipeline_mode<synchronous>, transform_indices = @transform_3, window_bounds = array<i64: 128, 64>}, {pipeline_mode = #tpu.pipeline_mode<synchronous>, transform_indices = @transform_4, window_bounds = array<i64: 1, 64>}, {pipeline_mode = #tpu.pipeline_mode<synchronous>, transform_indices = @transform_5, window_bounds = array<i64: 64, 4>}, {pipeline_mode = #tpu.pipeline_mode<synchronous>, transform_indices = @transform_6, window_bounds = array<i64: 1, 4>}, {transform_indices = @transform_7, window_bounds = array<i64: 16, 4>}]} {
    %c0 = arith.constant 0 : index
    %c0_0 = arith.constant 0 : index
    %0 = vector.load %arg1[%c0, %c0_0] : memref<16x16xf32, #tpu.memory_space<vmem>>, vector<16x16xf32>
    %1 = arith.truncf %0 : vector<16x16xf32> to vector<16x16xbf16>
    %c0_1 = arith.constant 0 : index
    %c0_2 = arith.constant 0 : index
    %2 = vector.load %arg2[%c0_1, %c0_2] : memref<16x128xbf16, #tpu.memory_space<vmem>>, vector<16x128xbf16>
    %cst = arith.constant dense<0.000000e+00> : vector<16x128xf32>
    %3 = tpu.matmul %1, %2, %cst {dimension_numbers = #tpu.dot_dimension_numbers<[1], [0], [0], [1], [0, 0, 1, 1], [], []>} : vector<16x16xbf16>, vector<16x128xbf16>, vector<16x128xf32> -> vector<16x128xf32>
    %c0_3 = arith.constant 0 : index
    %c0_4 = arith.constant 0 : index
    %4 = vector.load %arg3[%c0_3, %c0_4] : memref<1x128xf32, #tpu.memory_space<vmem>>, vector<1x128xf32>
    %5 = vector.broadcast %4 : vector<1x128xf32> to vector<16x128xf32>
    %6 = arith.addf %3, %5 : vector<16x128xf32>
    %cst_5 = arith.constant 0.000000e+00 : f32
    %7 = vector.broadcast %cst_5 : f32 to vector<16x128xf32>
    %8 = arith.maximumf %6, %7 : vector<16x128xf32>
    %9 = arith.truncf %8 : vector<16x128xf32> to vector<16x128xbf16>
    %c0_6 = arith.constant 0 : index
    %c0_7 = arith.constant 0 : index
    %10 = vector.load %arg4[%c0_6, %c0_7] : memref<128x64xbf16, #tpu.memory_space<vmem>>, vector<128x64xbf16>
    %cst_8 = arith.constant dense<0.000000e+00> : vector<16x64xf32>
    %11 = tpu.matmul %9, %10, %cst_8 {dimension_numbers = #tpu.dot_dimension_numbers<[1], [0], [0], [1], [0, 0, 1, 1], [], []>} : vector<16x128xbf16>, vector<128x64xbf16>, vector<16x64xf32> -> vector<16x64xf32>
    %c0_9 = arith.constant 0 : index
    %c0_10 = arith.constant 0 : index
    %12 = vector.load %arg5[%c0_9, %c0_10] : memref<1x64xf32, #tpu.memory_space<vmem>>, vector<1x64xf32>
    %13 = vector.broadcast %12 : vector<1x64xf32> to vector<16x64xf32>
    %14 = arith.addf %11, %13 : vector<16x64xf32>
    %cst_11 = arith.constant 0.000000e+00 : f32
    %15 = vector.broadcast %cst_11 : f32 to vector<16x64xf32>
    %16 = arith.maximumf %14, %15 : vector<16x64xf32>
    %17 = arith.truncf %16 : vector<16x64xf32> to vector<16x64xbf16>
    %c0_12 = arith.constant 0 : index
    %c0_13 = arith.constant 0 : index
    %18 = vector.load %arg6[%c0_12, %c0_13] : memref<64x4xbf16, #tpu.memory_space<vmem>>, vector<64x4xbf16>
    %cst_14 = arith.constant dense<0.000000e+00> : vector<16x4xf32>
    %19 = tpu.matmul %17, %18, %cst_14 {dimension_numbers = #tpu.dot_dimension_numbers<[1], [0], [0], [1], [0, 0, 1, 1], [], []>} : vector<16x64xbf16>, vector<64x4xbf16>, vector<16x4xf32> -> vector<16x4xf32>
    %c0_15 = arith.constant 0 : index
    %c0_16 = arith.constant 0 : index
    %20 = vector.load %arg7[%c0_15, %c0_16] : memref<1x4xf32, #tpu.memory_space<vmem>>, vector<1x4xf32>
    %21 = vector.broadcast %20 : vector<1x4xf32> to vector<16x4xf32>
    %22 = arith.addf %19, %21 : vector<16x4xf32>
    %cst_17 = arith.constant dense<0xFF800000> : vector<16xf32>
    %23 = vector.multi_reduction <maximumf>, %22, %cst_17 [1] : vector<16x4xf32> to vector<16xf32>
    %24 = vector.shape_cast %23 : vector<16xf32> to vector<16x1xf32>
    %25 = vector.broadcast %24 : vector<16x1xf32> to vector<16x4xf32>
    %26 = arith.subf %22, %25 : vector<16x4xf32>
    %27 = math.exp %26 : vector<16x4xf32>
    %cst_18 = arith.constant dense<0.000000e+00> : vector<16xf32>
    %28 = vector.multi_reduction <add>, %27, %cst_18 [1] : vector<16x4xf32> to vector<16xf32>
    %29 = vector.shape_cast %28 : vector<16xf32> to vector<16x1xf32>
    %30 = tpu.reciprocal %29 : vector<16x1xf32> -> vector<16x1xf32>
    %31 = vector.broadcast %30 : vector<16x1xf32> to vector<16x4xf32>
    %32 = arith.mulf %27, %31 : vector<16x4xf32>
    %c0_19 = arith.constant 0 : index
    %c0_20 = arith.constant 0 : index
    %33 = vector.load %arg8[%c0_19, %c0_20] : memref<16x4xf32, #tpu.memory_space<vmem>>, vector<16x4xf32>
    tpu.vector_store %arg8[%c0_19, %c0_20], %32 {strides = array<i32>} : memref<16x4xf32, #tpu.memory_space<vmem>>, vector<16x4xf32>,
    return
  }
  func.func @transform_0(%arg0: i32) -> (i32, i32) {
    %c0_i32 = arith.constant 0 : i32
    %c0_i32_0 = arith.constant 0 : i32
    return %arg0, %c0_i32 : i32, i32
  }
  func.func @transform_1(%arg0: i32) -> (i32, i32) {
    %c0_i32 = arith.constant 0 : i32
    %c0_i32_0 = arith.constant 0 : i32
    %c0_i32_1 = arith.constant 0 : i32
    return %c0_i32, %c0_i32_0 : i32, i32
  }
  func.func @transform_2(%arg0: i32) -> (i32, i32) {
    %c0_i32 = arith.constant 0 : i32
    %c0_i32_0 = arith.constant 0 : i32
    %c0_i32_1 = arith.constant 0 : i32
    return %c0_i32, %c0_i32_0 : i32, i32
  }
  func.func @transform_3(%arg0: i32) -> (i32, i32) {
    %c0_i32 = arith.constant 0 : i32
    %c0_i32_0 = arith.constant 0 : i32
    %c0_i32_1 = arith.constant 0 : i32
    return %c0_i32, %c0_i32_0 : i32, i32
  }
  func.func @transform_4(%arg0: i32) -> (i32, i32) {
    %c0_i32 = arith.constant 0 : i32
    %c0_i32_0 = arith.constant 0 : i32
    %c0_i32_1 = arith.constant 0 : i32
    return %c0_i32, %c0_i32_0 : i32, i32
  }
  func.func @transform_5(%arg0: i32) -> (i32, i32) {
    %c0_i32 = arith.constant 0 : i32
    %c0_i32_0 = arith.constant 0 : i32
    %c0_i32_1 = arith.constant 0 : i32
    return %c0_i32, %c0_i32_0 : i32, i32
  }
  func.func @transform_6(%arg0: i32) -> (i32, i32) {
    %c0_i32 = arith.constant 0 : i32
    %c0_i32_0 = arith.constant 0 : i32
    %c0_i32_1 = arith.constant 0 : i32
    return %c0_i32, %c0_i32_0 : i32, i32
  }
  func.func @transform_7(%arg0: i32) -> (i32, i32) {
    %c0_i32 = arith.constant 0 : i32
    %c0_i32_0 = arith.constant 0 : i32
    return %arg0, %c0_i32 : i32, i32
  }
}

</mosaic_0001>

<llo_original>
// kernel: tpu_custom_call.1
$region0: #{tpu_custom_call.1}
  #allocation0 [shape = 'u32[]', space=smem, size = 0x4, offset = 0x4, fixed_abs, tag = 'smem constant byte address 0x4 - core index']
  #allocation1 [shape = 'u32[72,128]{1,0:T(1,128)}', space=vmem, size = 0x9000, scoped, tag = 'internal scratch']
  %s0 = inlined_call_operand.vmem [shape: f32[64,16], index: 0, kind: input, shape index: {}]
  %s1 = inlined_call_operand.vmem [shape: bf16[16,128], index: 1, kind: input, shape index: {}]
  %s2 = inlined_call_operand.vmem [shape: f32[1,128], index: 2, kind: input, shape index: {}]
  %s3 = inlined_call_operand.vmem [shape: bf16[128,64], index: 3, kind: input, shape index: {}]
  %s4 = inlined_call_operand.vmem [shape: f32[1,64], index: 4, kind: input, shape index: {}]
  %s5 = inlined_call_operand.vmem [shape: bf16[64,4], index: 5, kind: input, shape index: {}]
  %s6 = inlined_call_operand.vmem [shape: f32[1,4], index: 6, kind: input, shape index: {}]
  %s7 = inlined_call_operand.vmem [shape: f32[64,4], index: 7, kind: output, shape index: {}]
  %s8 = sld [smem:[#allocation0]]
  $region61: #{tpu_custom_call.1} parent=0
    _
  %s10 = ssub.s32 1, %s8
  %s11 = scalar_select 0, %s10, %s8
  loop: start=0, step=1, limit=6
  $region2: #{tpu_custom_call.1} parent=0 // loop_pre_header
    _
  $region3: #{tpu_custom_call.1} parent=0 // loop_header
    %s13 = sphi 0, %s17
    %p14 = scmp.ge.s32.totalorder %s13, 6
    %s23 = sphi 0, %s25
    %s26 = sphi 0, %s23
    %s27 = sphi 0, %s26
    %s43 = sphi 0, %s27
    %s47 = sphi 0, %s47
    %s49 = sphi 0, %s47
    %s50 = sphi 0, %s49
    %s64 = sphi 0, %s50
    %s68 = sphi 0, %s68
    %s70 = sphi 0, %s68
    %s71 = sphi 0, %s70
    %s85 = sphi 0, %s71
    %s89 = sphi 0, %s89
    %s91 = sphi 0, %s89
    %s92 = sphi 0, %s91
    %s106 = sphi 0, %s92
    %s110 = sphi 0, %s110
    %s112 = sphi 0, %s110
    %s113 = sphi 0, %s112
    %s127 = sphi 0, %s113
    %s131 = sphi 0, %s131
    %s133 = sphi 0, %s131
    %s134 = sphi 0, %s133
    %s148 = sphi 0, %s134
    %s152 = sphi 0, %s152
    %s154 = sphi 0, %s152
    %s155 = sphi 0, %s154
    %s169 = sphi 0, %s155
    %s175 = sphi 0, %s177
    %s178 = sphi 0, %s175
    %s179 = sphi 0, %s178
    %s195 = sphi 0, %s179
  $region4: #{tpu_custom_call.1} parent=0 // loop_header_branch
    %16 = sbr.rel (%p14) target = $region8
  $region5: #{tpu_custom_call.1} parent=0 // loop_body
    %s18 = ssub.s32 %s13, 1
    %s19 = ssub.s32 %s13, 2
    %s20 = sadd.s32 %s13, 1
    %s21 = ssub.s32 %s13, %s20
    %p22 = scmp.eq.s32.totalorder %s21, 0
    %s24 = sadd.s32 %s23, 1
    %s25 = scalar_select %p22, %s23, %s24
    %p28 = pneg %p22
    %p29 = scmp.eq.s32.totalorder %s13, 3
    %p30 = por %p28, %p29
    %p31 = scmp.ne.s32.totalorder %s23, %s26
    %p32 = scmp.eq.s32.totalorder %s13, 0
    %p33 = por %p31, %p32
    %p34 = scmp.ne.s32.totalorder %s23, %s26
    %p35 = scmp.eq.s32.totalorder %s18, 3
    %p36 = por %p34, %p35
    %p37 = scmp.ne.s32.totalorder %s26, %s27
    %p38 = scmp.eq.s32.totalorder %s18, 0
    %p39 = por %p37, %p38
    %p40 = scmp.ne.s32.totalorder %s26, %s27
    %p41 = scmp.eq.s32.totalorder %s19, 3
    %p42 = por %p40, %p41
    %p44 = scmp.ne.s32.totalorder %s27, %s43
    %p45 = scmp.eq.s32.totalorder %s19, 0
    %p46 = por %p44, %p45
    %s48 = sadd.s32 %s47, 1
    %p51 = scmp.eq.s32.totalorder %s13, 3
    %p52 = scmp.ne.s32.totalorder %s47, %s49
    %p53 = scmp.eq.s32.totalorder %s13, 0
    %p54 = por %p52, %p53
    %p55 = scmp.ne.s32.totalorder %s47, %s49
    %p56 = scmp.eq.s32.totalorder %s18, 3
    %p57 = por %p55, %p56
    %p58 = scmp.ne.s32.totalorder %s49, %s50
    %p59 = scmp.eq.s32.totalorder %s18, 0
    %p60 = por %p58, %p59
    %p61 = scmp.ne.s32.totalorder %s49, %s50
    %p62 = scmp.eq.s32.totalorder %s19, 3
    %p63 = por %p61, %p62
    %p65 = scmp.ne.s32.totalorder %s50, %s64
    %p66 = scmp.eq.s32.totalorder %s19, 0
    %p67 = por %p65, %p66
    %s69 = sadd.s32 %s68, 1
    %p72 = scmp.eq.s32.totalorder %s13, 3
    %p73 = scmp.ne.s32.totalorder %s68, %s70
    %p74 = scmp.eq.s32.totalorder %s13, 0
    %p75 = por %p73, %p74
    %p76 = scmp.ne.s32.totalorder %s68, %s70
    %p77 = scmp.eq.s32.totalorder %s18, 3
    %p78 = por %p76, %p77
    %p79 = scmp.ne.s32.totalorder %s70, %s71
    %p80 = scmp.eq.s32.totalorder %s18, 0
    %p81 = por %p79, %p80
    %p82 = scmp.ne.s32.totalorder %s70, %s71
    %p83 = scmp.eq.s32.totalorder %s19, 3
    %p84 = por %p82, %p83
    %p86 = scmp.ne.s32.totalorder %s71, %s85
    %p87 = scmp.eq.s32.totalorder %s19, 0
    %p88 = por %p86, %p87
    %s90 = sadd.s32 %s89, 1
    %p93 = scmp.eq.s32.totalorder %s13, 3
    %p94 = scmp.ne.s32.totalorder %s89, %s91
    %p95 = scmp.eq.s32.totalorder %s13, 0
    %p96 = por %p94, %p95
    %p97 = scmp.ne.s32.totalorder %s89, %s91
    %p98 = scmp.eq.s32.totalorder %s18, 3
    %p99 = por %p97, %p98
    %p100 = scmp.ne.s32.totalorder %s91, %s92
    %p101 = scmp.eq.s32.totalorder %s18, 0
    %p102 = por %p100, %p101
    %p103 = scmp.ne.s32.totalorder %s91, %s92
    %p104 = scmp.eq.s32.totalorder %s19, 3
    %p105 = por %p103, %p104
    %p107 = scmp.ne.s32.totalorder %s92, %s106
    %p108 = scmp.eq.s32.totalorder %s19, 0
    %p109 = por %p107, %p108
    %s111 = sadd.s32 %s110, 1
    %p114 = scmp.eq.s32.totalorder %s13, 3
    %p115 = scmp.ne.s32.totalorder %s110, %s112
    %p116 = scmp.eq.s32.totalorder %s13, 0
    %p117 = por %p115, %p116
    %p118 = scmp.ne.s32.totalorder %s110, %s112
    %p119 = scmp.eq.s32.totalorder %s18, 3
    %p120 = por %p118, %p119
    %p121 = scmp.ne.s32.totalorder %s112, %s113
    %p122 = scmp.eq.s32.totalorder %s18, 0
    %p123 = por %p121, %p122
    %p124 = scmp.ne.s32.totalorder %s112, %s113
    %p125 = scmp.eq.s32.totalorder %s19, 3
    %p126 = por %p124, %p125
    %p128 = scmp.ne.s32.totalorder %s113, %s127
    %p129 = scmp.eq.s32.totalorder %s19, 0
    %p130 = por %p128, %p129
    %s132 = sadd.s32 %s131, 1
    %p135 = scmp.eq.s32.totalorder %s13, 3
    %p136 = scmp.ne.s32.totalorder %s131, %s133
    %p137 = scmp.eq.s32.totalorder %s13, 0
    %p138 = por %p136, %p137
    %p139 = scmp.ne.s32.totalorder %s131, %s133
    %p140 = scmp.eq.s32.totalorder %s18, 3
    %p141 = por %p139, %p140
    %p142 = scmp.ne.s32.totalorder %s133, %s134
    %p143 = scmp.eq.s32.totalorder %s18, 0
    %p144 = por %p142, %p143
    %p145 = scmp.ne.s32.totalorder %s133, %s134
    %p146 = scmp.eq.s32.totalorder %s19, 3
    %p147 = por %p145, %p146
    %p149 = scmp.ne.s32.totalorder %s134, %s148
    %p150 = scmp.eq.s32.totalorder %s19, 0
    %p151 = por %p149, %p150
    %s153 = sadd.s32 %s152, 1
    %p156 = scmp.eq.s32.totalorder %s13, 3
    %p157 = scmp.ne.s32.totalorder %s152, %s154
    %p158 = scmp.eq.s32.totalorder %s13, 0
    %p159 = por %p157, %p158
    %p160 = scmp.ne.s32.totalorder %s152, %s154
    %p161 = scmp.eq.s32.totalorder %s18, 3
    %p162 = por %p160, %p161
    %p163 = scmp.ne.s32.totalorder %s154, %s155
    %p164 = scmp.eq.s32.totalorder %s18, 0
    %p165 = por %p163, %p164
    %p166 = scmp.ne.s32.totalorder %s154, %s155
    %p167 = scmp.eq.s32.totalorder %s19, 3
    %p168 = por %p166, %p167
    %p170 = scmp.ne.s32.totalorder %s155, %s169
    %p171 = scmp.eq.s32.totalorder %s19, 0
    %p172 = por %p170, %p171
    %s173 = ssub.s32 %s13, %s20
    %p174 = scmp.eq.s32.totalorder %s173, 0
    %s176 = sadd.s32 %s175, 1
    %s177 = scalar_select %p174, %s175, %s176
    %p180 = pneg %p174
    %p181 = scmp.eq.s32.totalorder %s13, 3
    %p182 = por %p180, %p181
    %p183 = scmp.ne.s32.totalorder %s175, %s178
    %p184 = scmp.eq.s32.totalorder %s13, 0
    %p185 = por %p183, %p184
    %p186 = scmp.ne.s32.totalorder %s175, %s178
    %p187 = scmp.eq.s32.totalorder %s18, 3
    %p188 = por %p186, %p187
    %p189 = scmp.ne.s32.totalorder %s178, %s179
    %p190 = scmp.eq.s32.totalorder %s18, 0
    %p191 = por %p189, %p190
    %p192 = scmp.ne.s32.totalorder %s178, %s179
    %p193 = scmp.eq.s32.totalorder %s19, 3
    %p194 = por %p192, %p193
    %p196 = scmp.ne.s32.totalorder %s179, %s195
    %p197 = scmp.eq.s32.totalorder %s19, 0
    %p198 = por %p196, %p197
    %p199 = scmp.le.s32.totalorder 1, %s13
    %p200 = scmp.lt.s32.totalorder %s13, 5
    %p201 = pnand %p199, %p200
    %p202 = pneg %p201
    // Predicated region
    $region9: #{tpu_custom_call.1} parent=5 // pred_check
      _
    $region10: #{tpu_custom_call.1} parent=5 // pred_check_branch
      %204 = sbr.rel (%p201) target = $region12
    $region11: #{tpu_custom_call.1} parent=5 // pred_region
      %s205 = ssub.s32 %s13, 1
      // Predicated region
      $region13: #{tpu_custom_call.1} parent=11 // pred_check
        %p206 = pneg %p60
      $region14: #{tpu_custom_call.1} parent=11 // pred_check_branch
        %208 = sbr.rel (%p206) target = $region16
      $region15: #{tpu_custom_call.1} parent=11 // pred_region
        _
      $region16: #{tpu_custom_call.1} parent=11 // pred_fallthru
        _
      // Predicated region
      $region17: #{tpu_custom_call.1} parent=11 // pred_check
        %p209 = pneg %p81
      $region18: #{tpu_custom_call.1} parent=11 // pred_check_branch
        %211 = sbr.rel (%p209) target = $region20
      $region19: #{tpu_custom_call.1} parent=11 // pred_region
        _
      $region20: #{tpu_custom_call.1} parent=11 // pred_fallthru
        _
      // Predicated region
      $region21: #{tpu_custom_call.1} parent=11 // pred_check
        %p212 = pneg %p102
      $region22: #{tpu_custom_call.1} parent=11 // pred_check_branch
        %214 = sbr.rel (%p212) target = $region24
      $region23: #{tpu_custom_call.1} parent=11 // pred_region
        _
      $region24: #{tpu_custom_call.1} parent=11 // pred_fallthru
        _
      // Predicated region
      $region25: #{tpu_custom_call.1} parent=11 // pred_check
        %p215 = pneg %p123
      $region26: #{tpu_custom_call.1} parent=11 // pred_check_branch
        %217 = sbr.rel (%p215) target = $region28
      $region27: #{tpu_custom_call.1} parent=11 // pred_region
        _
      $region28: #{tpu_custom_call.1} parent=11 // pred_fallthru
        _
      // Predicated region
      $region29: #{tpu_custom_call.1} parent=11 // pred_check
        %p218 = pneg %p144
      $region30: #{tpu_custom_call.1} parent=11 // pred_check_branch
        %220 = sbr.rel (%p218) target = $region32
      $region31: #{tpu_custom_call.1} parent=11 // pred_region
        _
      $region32: #{tpu_custom_call.1} parent=11 // pred_fallthru
        _
      // Predicated region
      $region33: #{tpu_custom_call.1} parent=11 // pred_check
        %p221 = pneg %p165
      $region34: #{tpu_custom_call.1} parent=11 // pred_check_branch
        %223 = sbr.rel (%p221) target = $region36
      $region35: #{tpu_custom_call.1} parent=11 // pred_region
        _
      $region36: #{tpu_custom_call.1} parent=11 // pred_fallthru
        _
    $region12: #{tpu_custom_call.1} parent=5 // pred_fallthru
      _
    %p224 = scmp.lt.s32.totalorder %s13, 4
    // Predicated region
    $region37: #{tpu_custom_call.1} parent=5 // pred_check
      %p225 = pneg %p224
    $region38: #{tpu_custom_call.1} parent=5 // pred_check_branch
      %227 = sbr.rel (%p225) target = $region40
    $region39: #{tpu_custom_call.1} parent=5 // pred_region
      // Predicated region
      $region41: #{tpu_custom_call.1} parent=39 // pred_check
        %p228 = pneg %p33
      $region42: #{tpu_custom_call.1} parent=39 // pred_check_branch
        %230 = sbr.rel (%p228) target = $region44
      $region43: #{tpu_custom_call.1} parent=39 // pred_region
        %s231 = smul.u32 2, %s13
        %p232 = scmp.lt.s32.totalorder %s231, 7
        %s233 = scalar_select %p232, %s231, 7
        %s234 = smul.addr %s233, 8
        %s235 = scalar_lea.vmem %s0, %s234
        %s236 = smul.u32 2, %s13
      $region44: #{tpu_custom_call.1} parent=39 // pred_fallthru
        _
    $region40: #{tpu_custom_call.1} parent=5 // pred_fallthru
      _
    %p237 = scmp.le.s32.totalorder 1, %s13
    %p238 = scmp.lt.s32.totalorder %s13, 5
    %p239 = pnand %p237, %p238
    %p240 = pneg %p239
    // Predicated region
    $region45: #{tpu_custom_call.1} parent=5 // pred_check
      _
    $region46: #{tpu_custom_call.1} parent=5 // pred_check_branch
      %242 = sbr.rel (%p239) target = $region48
    $region47: #{tpu_custom_call.1} parent=5 // pred_region
      %s243 = ssub.s32 %s13, 1
      %s244 = smul.u32 2, %s18
      %p245 = scmp.lt.s32.totalorder %s244, 7
      %s246 = scalar_select %p245, %s244, 7
      %s247 = smul.addr %s246, 8
      %s248 = scalar_lea.vmem %s0, %s247
      %p249 = pneg %p39
      %p250 = pneg %p36
      %p251 = pneg %p60
      %p252 = pneg %p57
      %p253 = pneg %p81
      %p254 = pneg %p78
      %p255 = pneg %p102
      %p256 = pneg %p99
      %p257 = pneg %p123
      %p258 = pneg %p120
      %p259 = pneg %p144
      %p260 = pneg %p141
      %p261 = pneg %p165
      %p262 = pneg %p162
      %p263 = pneg %p191
      %p264 = pneg %p188
      %s265 = smul.u32 2, %s18
      %p266 = scmp.lt.s32.totalorder %s265, 7
      %s267 = scalar_select %p266, %s265, 7
      %s268 = smul.addr %s267, 8
      %s269 = scalar_lea.vmem %s7, %s268
      %s270 = smul.u32 2, %s18
      %p271 = scmp.lt.s32.totalorder %s270, 7
      %s272 = scalar_select %p271, %s270, 7
      %s273 = smul.addr %s272, 8
      %s274 = scalar_lea.vmem %s0, %s273
      %s275 = smul.u32 2, %s18
      %s276 = smul.u32 2, %s18
      %p277 = scmp.lt.s32.totalorder %s276, 7
      %s278 = scalar_select %p277, %s276, 7
      %s279 = smul.addr %s278, 8
      %s280 = scalar_lea.vmem %s7, %s279
      %s281 = smul.u32 2, %s18
      %v283 = vld [vmem:[%s274] sm:$0xff]
      %v284 = vld [vmem:[%s274 + $0x8] sm:$0xff]
      %v285 = vpack.c.bf16 %v284, %v283
      %v286 = vld [vmem:[%s1] sm:$0xf]
      %v287 = vld [vmem:[%s1 + $0x4] sm:$0xf]
      %v288 = vld [vmem:[%s2] sm:$0x1]
      %v290 = vperm.slane %v288, 0
      %v294 = vunpack.c.l.b16 %v286
      %v295 = vunpack.c.l.b16 %v287
      %v296 = vpack.c.b16 %v295, %v294
      %vm298 = vcmask 130048
      %v300 = vsel %vm298, %v285, 0
      %302 = vmatpush.bf16.msra.mxu0 0
      %303 = vmatpush.bf16.msra.mxu0 0
      %304 = vmatpush.bf16.msra.mxu0 0
      %305 = vmatpush.bf16.msra.mxu0 0
      %306 = vmatpush.bf16.msra.mxu0 0
      %307 = vmatpush.bf16.msra.mxu0 0
      %308 = vmatpush.bf16.msra.mxu0 0
      %309 = vmatpush.bf16.msra.mxu0 %v296
      %310 = vmatmul.bf16.gmra.mxu0 %v300
      %v311 = vpop.f32.mrf.mxu0
      %v312 = vadd.f32 %v290, %v311
      %v313 = vpop.f32.mrf.mxu0
      %v314 = vadd.f32 %v290, %v313
      %315 = vdwg.mxu0
      %v316 = vmax.f32 %v312, 0.0
      %v317 = vmax.f32 %v314, 0.0
      %v318 = vpack.c.bf16 %v317, %v316
      %v319 = vld [vmem:[%s3] sm:$0xf]
      %v320 = vld [vmem:[%s3 + $0x4] sm:$0xf]
      %v321 = vld [vmem:[%s3 + $0x8] sm:$0xf]
      %v322 = vld [vmem:[%s3 + $0xc] sm:$0xf]
      %v323 = vld [vmem:[%s3 + $0x10] sm:$0xf]
      %v324 = vld [vmem:[%s3 + $0x14] sm:$0xf]
      %v325 = vld [vmem:[%s3 + $0x18] sm:$0xf]
      %v326 = vld [vmem:[%s3 + $0x1c] sm:$0xf]
      %v327 = vld [vmem:[%s3 + $0x20] sm:$0xf]
      %v328 = vld [vmem:[%s3 + $0x24] sm:$0xf]
      %v329 = vld [vmem:[%s3 + $0x28] sm:$0xf]
      %v330 = vld [vmem:[%s3 + $0x2c] sm:$0xf]
      %v331 = vld [vmem:[%s3 + $0x30] sm:$0xf]
      %v332 = vld [vmem:[%s3 + $0x34] sm:$0xf]
      %v333 = vld [vmem:[%s3 + $0x38] sm:$0xf]
      %v334 = vld [vmem:[%s3 + $0x3c] sm:$0xf]
      %v335 = vld [vmem:[%s4] sm:$0x1]
      %v337 = vperm.slane %v335, 0
      %v355 = vunpack.c.l.b16 %v319
      %v356 = vunpack.c.l.b16 %v320
      %v357 = vunpack.c.l.b16 %v321
      %v358 = vunpack.c.l.b16 %v322
      %v359 = vunpack.c.l.b16 %v323
      %v360 = vunpack.c.l.b16 %v324
      %v361 = vunpack.c.l.b16 %v325
      %v362 = vunpack.c.l.b16 %v326
      %v363 = vunpack.c.l.b16 %v327
      %v364 = vunpack.c.l.b16 %v328
      %v365 = vunpack.c.l.b16 %v329
      %v366 = vunpack.c.l.b16 %v330
      %v367 = vunpack.c.l.b16 %v331
      %v368 = vunpack.c.l.b16 %v332
      %v369 = vunpack.c.l.b16 %v333
      %v370 = vunpack.c.l.b16 %v334
      %v371 = vpack.c.b16 %v356, %v355
      %v372 = vpack.c.b16 %v358, %v357
      %v373 = vpack.c.b16 %v360, %v359
      %v374 = vpack.c.b16 %v362, %v361
      %v375 = vpack.c.b16 %v364, %v363
      %v376 = vpack.c.b16 %v366, %v365
      %v377 = vpack.c.b16 %v368, %v367
      %v378 = vpack.c.b16 %v370, %v369
      %387 = vmatpush.bf16.msra.mxu0 %v378
      %388 = vmatpush.bf16.msra.mxu0 %v377
      %389 = vmatpush.bf16.msra.mxu0 %v376
      %390 = vmatpush.bf16.msra.mxu0 %v375
      %391 = vmatpush.bf16.msra.mxu0 %v374
      %392 = vmatpush.bf16.msra.mxu0 %v373
      %393 = vmatpush.bf16.msra.mxu0 %v372
      %394 = vmatpush.bf16.msra.mxu0 %v371
      %395 = vmatmul.bf16.gmra.mxu0 %v318
      %v396 = vpop.f32.mrf.mxu0
      %v397 = vadd.f32 %v337, %v396
      %v398 = vpop.f32.mrf.mxu0
      %v399 = vadd.f32 %v337, %v398
      %400 = vdwg.mxu0
      %v401 = vmax.f32 %v397, 0.0
      %v402 = vmax.f32 %v399, 0.0
      %v403 = vpack.c.bf16 %v402, %v401
      %v404 = vld [vmem:[%s5] sm:$0xf]
      %v405 = vld [vmem:[%s5 + $0x4] sm:$0xf]
      %v406 = vld [vmem:[%s5 + $0x8] sm:$0xf]
      %v407 = vld [vmem:[%s5 + $0xc] sm:$0xf]
      %v408 = vld [vmem:[%s5 + $0x10] sm:$0xf]
      %v409 = vld [vmem:[%s5 + $0x14] sm:$0xf]
      %v410 = vld [vmem:[%s5 + $0x18] sm:$0xf]
      %v411 = vld [vmem:[%s5 + $0x1c] sm:$0xf]
      %v412 = vld [vmem:[%s6] sm:$0x1]
      %v414 = vperm.slane %v412, 0
      %v424 = vunpack.c.l.b16 %v404
      %v425 = vunpack.c.l.b16 %v405
      %v426 = vunpack.c.l.b16 %v406
      %v427 = vunpack.c.l.b16 %v407
      %v428 = vunpack.c.l.b16 %v408
      %v429 = vunpack.c.l.b16 %v409
      %v430 = vunpack.c.l.b16 %v410
      %v431 = vunpack.c.l.b16 %v411
      %v432 = vpack.c.b16 %v425, %v424
      %v433 = vpack.c.b16 %v427, %v426
      %v434 = vpack.c.b16 %v429, %v428
      %v435 = vpack.c.b16 %v431, %v430
      %vm440 = vcmask 523264
      %v442 = vsel %vm440, %v403, 0
      %444 = vmatpush.bf16.msra.mxu0 0
      %445 = vmatpush.bf16.msra.mxu0 0
      %446 = vmatpush.bf16.msra.mxu0 0
      %447 = vmatpush.bf16.msra.mxu0 0
      %448 = vmatpush.bf16.msra.mxu0 %v435
      %449 = vmatpush.bf16.msra.mxu0 %v434
      %450 = vmatpush.bf16.msra.mxu0 %v433
      %451 = vmatpush.bf16.msra.mxu0 %v432
      %452 = vmatmul.bf16.gmra.mxu0 %v442
      %v453 = vpop.f32.mrf.mxu0
      %v454 = vadd.f32 %v414, %v453
      %v455 = vpop.f32.mrf.mxu0
      %v456 = vadd.f32 %v414, %v455
      %457 = vdwg.mxu0
      %vm458 = vcmask 31744
      %v459 = vsel %vm458, %v454, -inf
      %460 = vmax.xlane.f32.xlu0 %v459
      %v461 = vpop.xlane.xlu0 %460
      %v462 = vsel %vm458, %v456, -inf
      %463 = vmax.xlane.f32.xlu0 %v462
      %v464 = vpop.xlane.xlu0 %463
      %v465 = vsub.f32 %v454, %v461
      %v466 = vsub.f32 %v456, %v464
      %v467 = vmul.f32 %v465, 1.442695
      %v468 = vpow.pop %v467
      %v469 = vmul.f32 %v466, 1.442695
      %v470 = vpow.pop %v469
      %v471 = vsel %vm458, %v468, 0.0
      %472 = vadd.xlane.f32.xlu0 %v471
      %v473 = vpop.xlane.xlu0 %472
      %v474 = vsel %vm458, %v470, 0.0
      %475 = vadd.xlane.f32.xlu0 %v474
      %v476 = vpop.xlane.xlu0 %475
      %v477 = vrcp.pop %v473
      %v478 = vmul.f32 %v473, %v477
      %v479 = vsub.f32 1.0, %v478
      %v480 = vmul.f32 %v477, %v479
      %v481 = vadd.f32 %v477, %v480
      %vm482 = vweird.f32 %v473
      %vm483 = vweird.f32 %v477
      %vm484 = vmor %vm482, %vm483
      %v485 = vsel %vm484, %v477, %v481
      %v486 = vand.u32 2147483647, %v473
      %vm487 = vcmp.eq.f32.partialorder %v486, 8.507059e+37
      %v488 = vand.u32 %v473, 2147483648
      %v489 = vor.u32 1.1754944e-38, %v488
      %v490 = vsel %vm487, %v489, %v485
      %v491 = vrcp.pop %v476
      %v492 = vmul.f32 %v476, %v491
      %v493 = vsub.f32 1.0, %v492
      %v494 = vmul.f32 %v491, %v493
      %v495 = vadd.f32 %v491, %v494
      %vm496 = vweird.f32 %v476
      %vm497 = vweird.f32 %v491
      %vm498 = vmor %vm496, %vm497
      %v499 = vsel %vm498, %v491, %v495
      %v500 = vand.u32 2147483647, %v476
      %vm501 = vcmp.eq.f32.partialorder %v500, 8.507059e+37
      %v502 = vand.u32 %v476, 2147483648
      %v503 = vor.u32 1.1754944e-38, %v502
      %v504 = vsel %vm501, %v503, %v499
      %v505 = vmul.f32 %v468, %v490
      %v506 = vmul.f32 %v470, %v504
      %507 = vst.msk [vmem:[%s280] sm:$0xff] %vm458, %v505
      %508 = vst.msk [vmem:[%s280 + $0x8] sm:$0xff] %vm458, %v506
      %s509 = smul.u32 2, %s18
      %p510 = scmp.lt.s32.totalorder %s509, 7
      %s511 = scalar_select %p510, %s509, 7
      %s512 = smul.addr %s511, 8
      %s513 = scalar_lea.vmem %s7, %s512
      // Predicated region
      $region49: #{tpu_custom_call.1} parent=47 // pred_check
        %p514 = pneg %p188
      $region50: #{tpu_custom_call.1} parent=47 // pred_check_branch
        %516 = sbr.rel (%p514) target = $region52
      $region51: #{tpu_custom_call.1} parent=47 // pred_region
        %s517 = smul.u32 2, %s18
      $region52: #{tpu_custom_call.1} parent=47 // pred_fallthru
        _
    $region48: #{tpu_custom_call.1} parent=5 // pred_fallthru
      _
    %p518 = scmp.le.s32.totalorder 2, %s13
    // Predicated region
    $region53: #{tpu_custom_call.1} parent=5 // pred_check
      %p519 = pneg %p518
    $region54: #{tpu_custom_call.1} parent=5 // pred_check_branch
      %521 = sbr.rel (%p519) target = $region56
    $region55: #{tpu_custom_call.1} parent=5 // pred_region
      %s522 = ssub.s32 %s13, 2
      // Predicated region
      $region57: #{tpu_custom_call.1} parent=55 // pred_check
        %p523 = pneg %p194
      $region58: #{tpu_custom_call.1} parent=55 // pred_check_branch
        %525 = sbr.rel (%p523) target = $region60
      $region59: #{tpu_custom_call.1} parent=55 // pred_region
        %s526 = smul.u32 2, %s19
        %p527 = scmp.lt.s32.totalorder %s526, 7
        %s528 = scalar_select %p527, %s526, 7
        %s529 = smul.addr %s528, 8
        %s530 = scalar_lea.vmem %s7, %s529
      $region60: #{tpu_custom_call.1} parent=55 // pred_fallthru
        _
    $region56: #{tpu_custom_call.1} parent=5 // pred_fallthru
      _
  $region6: #{tpu_custom_call.1} parent=0 // loop_footer
    %s17 = sadd.s32 1, %s13
  $region7: #{tpu_custom_call.1} parent=0 // loop_footer_branch
    %12 = sbr.rel target = $region3
  $region8: #{tpu_custom_call.1} parent=0 // loop_exit
    _

</llo_original>
